<compile_context>
chip_gen: v6e
topology: v6e:2x2x1
jax: 0.10.0
libtpu: 0.0.40
codegen_flags: <defaults>
</compile_context>

<pallas_src>
import math

import jax
import jax.numpy as jnp
from jax.experimental import pallas as pl
from jax.experimental.pallas import tpu as pltpu

_LANE_W = 512  # lane-dense slab width (multiple of 128)


def _round_up(x, m):
    return (x + m - 1) // m * m


def _boxmuller_kernel(bits_ref, out_ref):
    """Turn a (TILE_R, W) tile of uint32 random bits into N(0,1) samples."""
    w = out_ref.shape[-1]
    half = w // 2
    bits = bits_ref[...]
    b1 = bits[:, :half]
    b2 = bits[:, half:]

    # Top 24 bits -> uniform in (0, 1); the +0.5 keeps u1 strictly away from 0
    # so log(u1) is finite.
    inv24 = jnp.float32(1.0 / 16777216.0)
    u1 = ((b1 >> 8).astype(jnp.float32) + jnp.float32(0.5)) * inv24
    u2 = ((b2 >> 8).astype(jnp.float32) + jnp.float32(0.5)) * inv24

    # Box-Muller using BOTH branches: 2 normals per (u1, u2) pair.
    r = jnp.sqrt(jnp.float32(-2.0) * jnp.log(u1))
    theta = jnp.float32(2.0 * math.pi) * u2
    z0 = r * jnp.cos(theta)
    z1 = r * jnp.sin(theta)
    out_ref[...] = jnp.concatenate([z0, z1], axis=-1)


def pallas_randn(key, batch_size: int, seq_len: int, hidden_size: int):
    """Generate (batch, seq, hidden) standard-normal samples via a Pallas kernel."""
    total = batch_size * seq_len * hidden_size
    w = _LANE_W
    rows = max(1, -(-total // w))          # ceil(total / w)

    # Large tiles (amortize per-grid-step overhead) but capped so the
    # double-buffered input + output tiles stay a few MiB on every chip gen.
    tile_r = min(512, _round_up(rows, 8))
    padded_rows = _round_up(rows, tile_r)
    grid = (padded_rows // tile_r,)

    # One uint32 of entropy per output element (two uniforms -> two normals).
    # TODO(synk): move bit generation on-chip (pltpu.prng_*) once the target
    # runner lowers those primitives; the transform stays identical.
    bits = jax.random.bits(key, (padded_rows, w), dtype=jnp.uint32)

    slab = pl.pallas_call(
        _boxmuller_kernel,
        out_shape=jax.ShapeDtypeStruct((padded_rows, w), jnp.float32),
        grid=grid,
        in_specs=[pl.BlockSpec((tile_r, w), lambda i: (i, 0))],
        out_specs=pl.BlockSpec((tile_r, w), lambda i: (i, 0)),
        compiler_params=pltpu.CompilerParams(
            dimension_semantics=("parallel",),
        ),
    )(bits)

    return slab.reshape(-1)[:total].reshape(batch_size, seq_len, hidden_size)


class MockOutput:
    def __init__(self, hidden_states):
        self.last_hidden_state = hidden_states
        self.hidden_states = [hidden_states]


class MockModelPallas:
    """JAX/Pallas port of MockModel: returns fresh N(0,1) hidden states."""

    def __init__(self, hidden_size=768, seed=0):
        self.hidden_size = hidden_size
        self._key = jax.random.PRNGKey(seed)

    def forward(self, **kwargs):
        input_ids = kwargs.get("input_ids", jnp.zeros((1, 1), dtype=jnp.int32))
        batch_size, seq_len = int(input_ids.shape[0]), int(input_ids.shape[1])
        # Fresh draw per forward call, matching torch.randn semantics.
        self._key, subkey = jax.random.split(self._key)
        hidden_states = pallas_randn(subkey, batch_size, seq_len, self.hidden_size)
        return MockOutput(hidden_states)


if __name__ == "__main__":
    key = jax.random.PRNGKey(0)
    batch, seq, hidden = 2, 8, 128  # small shapes consistent with the module

    # Deterministic example input; only its shape matters to the forward pass.
    input_ids = jax.random.randint(key, (batch, seq), 0, 1000, dtype=jnp.int32)

    model = MockModelPallas(hidden_size=hidden, seed=0)
    out = model.forward(input_ids=input_ids)

    hs = jax.block_until_ready(out.last_hidden_state)
    assert hs.shape == (batch, seq, hidden)
    assert hs.dtype == jnp.float32
    assert len(out.hidden_states) == 1
    # Sanity: samples should look roughly standard-normal.
    assert abs(float(jnp.mean(hs))) < 0.2
    assert 0.7 < float(jnp.std(hs)) < 1.3
    print("KERNEL_OK")
</pallas_src>

<mosaic_0001>
module attributes {stable_mosaic.version = 11 : i64} {
  func.func @_boxmuller_kernel(%arg0: i32, %arg1: memref<8x512xi32, #tpu.memory_space<vmem>>, %arg2: memref<8x512xf32, #tpu.memory_space<vmem>>) attributes {dimension_semantics = [#tpu.dimension_semantics<parallel>], iteration_bounds = array<i64: 1>, scalar_prefetch = 0 : i64, scratch_operands = 0 : i64, tpu.core_type = #tpu.core_type<tc>, window_params = [{transform_indices = @transform_0, window_bounds = array<i64: 8, 512>}, {transform_indices = @transform_1, window_bounds = array<i64: 8, 512>}]} {
    %c0 = arith.constant 0 : index
    %c0_0 = arith.constant 0 : index
    %0 = vector.load %arg1[%c0, %c0_0] : memref<8x512xi32, #tpu.memory_space<vmem>>, vector<8x512xi32>
    %1 = vector.extract_strided_slice %0 {offsets = [0, 0], sizes = [8, 256], strides = [1, 1]} : vector<8x512xi32> to vector<8x256xi32>
    %2 = vector.extract_strided_slice %0 {offsets = [0, 256], sizes = [8, 256], strides = [1, 1]} : vector<8x512xi32> to vector<8x256xi32>
    %c8_i32 = arith.constant 8 : i32
    %3 = vector.broadcast %c8_i32 : i32 to vector<8x256xi32>
    %4 = arith.shrui %1, %3 : vector<8x256xi32>
    %5 = arith.uitofp %4 : vector<8x256xi32> to vector<8x256xf32>
    %cst = arith.constant 5.000000e-01 : f32
    %6 = vector.broadcast %cst : f32 to vector<8x256xf32>
    %7 = arith.addf %5, %6 : vector<8x256xf32>
    %cst_1 = arith.constant 5.96046448E-8 : f32
    %8 = vector.broadcast %cst_1 : f32 to vector<8x256xf32>
    %9 = arith.mulf %7, %8 : vector<8x256xf32>
    %c8_i32_2 = arith.constant 8 : i32
    %10 = vector.broadcast %c8_i32_2 : i32 to vector<8x256xi32>
    %11 = arith.shrui %2, %10 : vector<8x256xi32>
    %12 = arith.uitofp %11 : vector<8x256xi32> to vector<8x256xf32>
    %cst_3 = arith.constant 5.000000e-01 : f32
    %13 = vector.broadcast %cst_3 : f32 to vector<8x256xf32>
    %14 = arith.addf %12, %13 : vector<8x256xf32>
    %cst_4 = arith.constant 5.96046448E-8 : f32
    %15 = vector.broadcast %cst_4 : f32 to vector<8x256xf32>
    %16 = arith.mulf %14, %15 : vector<8x256xf32>
    %17 = math.log %9 : vector<8x256xf32>
    %cst_5 = arith.constant -2.000000e+00 : f32
    %18 = vector.broadcast %cst_5 : f32 to vector<8x256xf32>
    %19 = arith.mulf %18, %17 : vector<8x256xf32>
    %20 = math.sqrt %19 : vector<8x256xf32>
    %cst_6 = arith.constant 6.28318548 : f32
    %21 = vector.broadcast %cst_6 : f32 to vector<8x256xf32>
    %22 = arith.mulf %21, %16 : vector<8x256xf32>
    %23 = math.cos %22 : vector<8x256xf32>
    %24 = arith.mulf %20, %23 : vector<8x256xf32>
    %25 = math.sin %22 : vector<8x256xf32>
    %26 = arith.mulf %20, %25 : vector<8x256xf32>
    %27 = tpu.concatenate %24, %26 in 1 : vector<8x256xf32>, vector<8x256xf32> -> vector<8x512xf32>
    %c0_7 = arith.constant 0 : index
    %c0_8 = arith.constant 0 : index
    %28 = vector.load %arg2[%c0_7, %c0_8] : memref<8x512xf32, #tpu.memory_space<vmem>>, vector<8x512xf32>
    tpu.vector_store %arg2[%c0_7, %c0_8], %27 {strides = array<i32>} : memref<8x512xf32, #tpu.memory_space<vmem>>, vector<8x512xf32>,
    return
  }
  func.func @transform_0(%arg0: i32) -> (i32, i32) {
    %c0_i32 = arith.constant 0 : i32
    %c0_i32_0 = arith.constant 0 : i32
    return %arg0, %c0_i32 : i32, i32
  }
  func.func @transform_1(%arg0: i32) -> (i32, i32) {
    %c0_i32 = arith.constant 0 : i32
    %c0_i32_0 = arith.constant 0 : i32
    return %arg0, %c0_i32 : i32, i32
  }
}

</mosaic_0001>

<llo_original>
// kernel: tpu_custom_call.1
$region0: #{tpu_custom_call.1}
  #allocation0 [shape = 'u32[]', space=smem, size = 0x4, offset = 0x4, fixed_abs, tag = 'smem constant byte address 0x4 - core index']
  #allocation1 [shape = 'u32[144,128]{1,0:T(1,128)}', space=vmem, size = 0x12000, scoped, tag = 'internal scratch']
  %s0 = inlined_call_operand.hbm [shape: u32[8,512], index: 0, kind: input, shape index: {}]
  %s1 = inlined_call_operand.hbm [shape: f32[8,512], index: 1, kind: output, shape index: {}]
  %s2 = sld [smem:[#allocation0]]
  $region18: #{tpu_custom_call.1} parent=0
    _
  %s4 = ssub.s32 1, %s2
  %s5 = scalar_select 0, %s4, %s2
  $region1: #{tpu_custom_call.1} parent=0
    #allocation2 [shape = 'u8[16384]{0}', space=vmem, size = 0x4000, scoped, tag = 'input window, operand 0, single buffered']
    #allocation3 [shape = 's32[1]{0}', space=sflag, size = 0x4, scoped, tag = 'scoped memory for tpu_custom_call.1']
    #allocation4 [shape = 's32[1]{0}', space=sflag, size = 0x4, scoped, tag = 'scoped memory for tpu_custom_call.1']
    #allocation5 [shape = 'u8[16384]{0}', space=vmem, size = 0x4000, scoped, tag = 'output window, operand 0, single buffered']
    %6 = vsyncpa [#allocation3], 0
    %7 = vsyncpa [#allocation4], 0
    // Predicated region
    $region2: #{tpu_custom_call.1} parent=1 // pred_check
      _
    $region3: #{tpu_custom_call.1} parent=1 // pred_check_branch
      %9 = sbr.rel (0) target = $region5
    $region4: #{tpu_custom_call.1} parent=1 // pred_region
      %s11 = ssub.s32 512, 512
      %12 = vsyncadd [#allocation3], %s11
      %s14 = sshll.u32 [#allocation2], 4
      %s15 = int_to_ptr.vmem [resolvable:$true] %s14
      %17 = dma.hbm_to_vmem [thread:$0]  %s0, 512, %s15, [#allocation3]
    $region5: #{tpu_custom_call.1} parent=1 // pred_fallthru
      _
    // Predicated region
    $region6: #{tpu_custom_call.1} parent=1 // pred_check
      _
    $region7: #{tpu_custom_call.1} parent=1 // pred_check_branch
      %19 = sbr.rel (0) target = $region9
    $region8: #{tpu_custom_call.1} parent=1 // pred_region
      %20 = dma.done [#allocation3], 512
    $region9: #{tpu_custom_call.1} parent=1 // pred_fallthru
      _
    %v21 = vld [vmem:[#allocation2] sm:$0xff]
    %v22 = vld [vmem:[#allocation2 + $0x8] sm:$0xff]
    %v23 = vld [vmem:[#allocation2 + $0x10] sm:$0xff]
    %v24 = vld [vmem:[#allocation2 + $0x18] sm:$0xff]
    %v25 = vshrl.u32 %v21, 8
    %v26 = vshrl.u32 %v22, 8
    %v27 = vshrl.u32 %v25, 16
    %v28 = vand.u32 %v25, 65535
    %v29 = vcvt.s32.f32 %v27
    %v30 = vmul.f32 %v29, 65536.0
    %v31 = vcvt.s32.f32 %v28
    %v32 = vadd.f32 %v30, %v31
    %v33 = vshrl.u32 %v26, 16
    %v34 = vand.u32 %v26, 65535
    %v35 = vcvt.s32.f32 %v33
    %v36 = vmul.f32 %v35, 65536.0
    %v37 = vcvt.s32.f32 %v34
    %v38 = vadd.f32 %v36, %v37
    %v39 = vadd.f32 %v32, 0.5
    %v40 = vadd.f32 %v38, 0.5
    %v41 = vmul.f32 %v39, 5.9604645e-08
    %v42 = vmul.f32 %v40, 5.9604645e-08
    %v43 = vshrl.u32 %v23, 8
    %v44 = vshrl.u32 %v24, 8
    %v45 = vshrl.u32 %v43, 16
    %v46 = vand.u32 %v43, 65535
    %v47 = vcvt.s32.f32 %v45
    %v48 = vmul.f32 %v47, 65536.0
    %v49 = vcvt.s32.f32 %v46
    %v50 = vadd.f32 %v48, %v49
    %v51 = vshrl.u32 %v44, 16
    %v52 = vand.u32 %v44, 65535
    %v53 = vcvt.s32.f32 %v51
    %v54 = vmul.f32 %v53, 65536.0
    %v55 = vcvt.s32.f32 %v52
    %v56 = vadd.f32 %v54, %v55
    %v57 = vadd.f32 %v50, 0.5
    %v58 = vadd.f32 %v56, 0.5
    %v59 = vmul.f32 %v57, 5.9604645e-08
    %v60 = vmul.f32 %v58, 5.9604645e-08
    %v61 = vlog2.pop %v41
    %v62 = vmul.f32 %v61, 0.6931472
    %v63 = vlog2.pop %v42
    %v64 = vmul.f32 %v63, 0.6931472
    %v65 = vmul.f32 %v62, -2.0
    %v66 = vmul.f32 %v64, -2.0
    %v67 = vrsqrt.pop %v65
    %v68 = vmul.f32 %v65, %v67
    %vm69 = vcmp.eq.f32.partialorder %v65, inf
    %v70 = vsel %vm69, %v65, %v68
    %vm71 = vcmp.eq.f32.partialorder %v65, 0.0
    %v72 = vand.u32 %v65, 2147483648
    %v73 = vsel %vm71, %v72, %v70
    %v74 = vrsqrt.pop %v66
    %v75 = vmul.f32 %v66, %v74
    %vm76 = vcmp.eq.f32.partialorder %v66, inf
    %v77 = vsel %vm76, %v66, %v75
    %vm78 = vcmp.eq.f32.partialorder %v66, 0.0
    %v79 = vand.u32 %v66, 2147483648
    %v80 = vsel %vm78, %v79, %v77
    %v81 = vmul.f32 %v59, 6.2831855
    %v82 = vmul.f32 %v60, 6.2831855
    %v83 = vand.u32 2147483647, %v81
    %vm84 = vcmp.le.f32.partialorder %v83, 0.7853982
    %vm85 = vcmp.lt.s32.totalorder %v81, 0
    %v86 = vand.u32 %v81, 2139095040
    %v87 = vshrl.u32 %v86, 23
    %v88 = vsub.s32 %v87, 127
    %v89 = vand.u32 2147483647, %v81
    %v90 = vand.u32 %v89, 8388607
    %v91 = vor.u32 %v90, 8388608
    %v92 = vsub.s32 0, %v91
    %v93 = vadd.s32 %v88, 1
    %vm94 = vcmp.gt.s32.totalorder %v93, 0
    %v95 = vsel %vm94, %v93, 0
    %v96 = vshrl.u32 %v95, 5
    %v97 = vand.u32 %v95, 31
    %v98 = vsub.s32 32, %v97
    %v99 = vshrl.u32 683565275, %v98
    %v100 = vshll.u32 683565275, %v97
    %v101 = vshrl.u32 2475754826, %v98
    %v102 = vor.u32 %v100, %v101
    %v103 = vshll.u32 2475754826, %v97
    %v104 = vshrl.u32 2131351028, %v98
    %v105 = vor.u32 %v103, %v104
    %v106 = vshll.u32 2131351028, %v97
    %v107 = vshrl.u32 2102212464, %v98
    %v108 = vor.u32 %v106, %v107
    %v109 = vshll.u32 2102212464, %v97
    %v110 = vshrl.u32 920167782, %v98
    %v111 = vor.u32 %v109, %v110
    %v112 = vshll.u32 920167782, %v97
    %v113 = vshrl.u32 1326507024, %v98
    %v114 = vor.u32 %v112, %v113
    %vm115 = vcmp.lt.s32.totalorder %v96, 1
    %vm116 = vcmp.lt.s32.totalorder %v96, 2
    %vm117 = vcmp.lt.s32.totalorder %v96, 3
    %vm118 = vcmp.lt.s32.totalorder %v96, 4
    %v119 = vsel %vm115, %v99, %v102
    %v120 = vsel %vm118, %v108, 2102212464
    %v121 = vsel %vm117, %v105, %v120
    %v122 = vsel %vm116, %v119, %v121
    %v123 = vsel %vm115, %v102, %v105
    %v124 = vsel %vm118, %v111, 920167782
    %v125 = vsel %vm117, %v108, %v124
    %v126 = vsel %vm116, %v123, %v125
    %v127 = vsel %vm115, %v105, %v108
    %v128 = vsel %vm118, %v114, 1326507024
    %v129 = vsel %vm117, %v111, %v128
    %v130 = vsel %vm116, %v127, %v129
    %v131 = vshll.u32 %v91, 8
    %v132 = vmul.u32.u64.compose %v131, %v130
    %v133 = vextract.low.u32 %v132
    %v134 = vextract.high.u32 %v132
    %v135 = vmul.u32.u64.compose %v131, %v126
    %v136 = vextract.low.u32 %v135
    %v137 = vextract.high.u32 %v135
    %v138 = vmul.u32 %v131, %v122
    %v139 = vadd.s32 %v134, %v136
    %vm140 = vc.u32 %v134, %v136
    %v141 = vadd.s32 %v137, 1
    %v142 = vsel %vm140, %v141, %v137
    %v143 = vadd.s32 %v138, %v142
    %v144 = vadd.s32 %v143, 536870912
    %v145 = vshrl.u32 %v144, 30
    %v146 = vshll.u32 %v145, 30
    %v147 = vsub.s32 %v143, %v146
    %vm148 = vcmp.lt.s32.totalorder %v147, 0
    %v149 = vsub.s32 0, %v147
    %v150 = vsel %vm148, %v149, %v147
    %v151 = vclz %v150
    %v152 = vsub.s32 %v151, 2
    %vm153 = vcmp.gt.s32.totalorder 0, %v152
    %v154 = vsel %vm153, 0, %v152
    %v155 = vsub.s32 32, %v154
    %v156 = vshll.u32 %v147, %v154
    %v157 = vshrl.u32 %v139, %v155
    %v158 = vor.u32 %v156, %v157
    %v159 = vsub.s32 4294967266, %v154
    %v160 = vadd.s32 %v159, 127
    %v161 = vshll.u32 %v160, 23
    %v162 = vor.u32 4788187, %v161
    %v163 = vand.u32 2147483647, %v162
    %v165 = vcvt.s32.f32 %v158
    %v166 = vmul.f32 %v165, %v163
    %v167 = vxor.u32 %v166, 2147483648
    %v168 = vsel %vm85, %v167, %v166
    %v169 = vsub.s32 4, %v145
    %v170 = vsel %vm85, %v169, %v145
    %v171 = vsel %vm84, %v81, %v168
    %v172 = vsel %vm84, 0, %v170
    %v173 = vcosq.f32.pop %v171
    %v174 = vsinq.f32.pop %v171
    %vm175 = vweird.f32 %v81
    %v176 = vand.u32 %v172, 3
    %vm177 = vcmp.lt.s32.totalorder %v176, 2
    %vm178 = vcmp.eq.s32.totalorder %v176, 0
    %v179 = vxor.u32 %v174, 2147483648
    %v180 = vsel %vm178, %v173, %v179
    %vm181 = vcmp.eq.s32.totalorder %v176, 2
    %v182 = vxor.u32 %v173, 2147483648
    %v183 = vsel %vm181, %v182, %v174
    %v184 = vsel %vm177, %v180, %v183
    %v185 = vsel %vm175, nan, %v184
    %v186 = vand.u32 2147483647, %v82
    %vm187 = vcmp.le.f32.partialorder %v186, 0.7853982
    %vm188 = vcmp.lt.s32.totalorder %v82, 0
    %v189 = vand.u32 %v82, 2139095040
    %v190 = vshrl.u32 %v189, 23
    %v191 = vsub.s32 %v190, 127
    %v192 = vand.u32 2147483647, %v82
    %v193 = vand.u32 %v192, 8388607
    %v194 = vor.u32 %v193, 8388608
    %v195 = vsub.s32 0, %v194
    %v196 = vadd.s32 %v191, 1
    %vm197 = vcmp.gt.s32.totalorder %v196, 0
    %v198 = vsel %vm197, %v196, 0
    %v199 = vshrl.u32 %v198, 5
    %v200 = vand.u32 %v198, 31
    %v201 = vsub.s32 32, %v200
    %v202 = vshrl.u32 683565275, %v201
    %v203 = vshll.u32 683565275, %v200
    %v204 = vshrl.u32 2475754826, %v201
    %v205 = vor.u32 %v203, %v204
    %v206 = vshll.u32 2475754826, %v200
    %v207 = vshrl.u32 2131351028, %v201
    %v208 = vor.u32 %v206, %v207
    %v209 = vshll.u32 2131351028, %v200
    %v210 = vshrl.u32 2102212464, %v201
    %v211 = vor.u32 %v209, %v210
    %v212 = vshll.u32 2102212464, %v200
    %v213 = vshrl.u32 920167782, %v201
    %v214 = vor.u32 %v212, %v213
    %v215 = vshll.u32 920167782, %v200
    %v216 = vshrl.u32 1326507024, %v201
    %v217 = vor.u32 %v215, %v216
    %vm218 = vcmp.lt.s32.totalorder %v199, 1
    %vm219 = vcmp.lt.s32.totalorder %v199, 2
    %vm220 = vcmp.lt.s32.totalorder %v199, 3
    %vm221 = vcmp.lt.s32.totalorder %v199, 4
    %v222 = vsel %vm218, %v202, %v205
    %v223 = vsel %vm221, %v211, 2102212464
    %v224 = vsel %vm220, %v208, %v223
    %v225 = vsel %vm219, %v222, %v224
    %v226 = vsel %vm218, %v205, %v208
    %v227 = vsel %vm221, %v214, 920167782
    %v228 = vsel %vm220, %v211, %v227
    %v229 = vsel %vm219, %v226, %v228
    %v230 = vsel %vm218, %v208, %v211
    %v231 = vsel %vm221, %v217, 1326507024
    %v232 = vsel %vm220, %v214, %v231
    %v233 = vsel %vm219, %v230, %v232
    %v234 = vshll.u32 %v194, 8
    %v235 = vmul.u32.u64.compose %v234, %v233
    %v236 = vextract.low.u32 %v235
    %v237 = vextract.high.u32 %v235
    %v238 = vmul.u32.u64.compose %v234, %v229
    %v239 = vextract.low.u32 %v238
    %v240 = vextract.high.u32 %v238
    %v241 = vmul.u32 %v234, %v225
    %v242 = vadd.s32 %v237, %v239
    %vm243 = vc.u32 %v237, %v239
    %v244 = vadd.s32 %v240, 1
    %v245 = vsel %vm243, %v244, %v240
    %v246 = vadd.s32 %v241, %v245
    %v247 = vadd.s32 %v246, 536870912
    %v248 = vshrl.u32 %v247, 30
    %v249 = vshll.u32 %v248, 30
    %v250 = vsub.s32 %v246, %v249
    %vm251 = vcmp.lt.s32.totalorder %v250, 0
    %v252 = vsub.s32 0, %v250
    %v253 = vsel %vm251, %v252, %v250
    %v254 = vclz %v253
    %v255 = vsub.s32 %v254, 2
    %vm256 = vcmp.gt.s32.totalorder 0, %v255
    %v257 = vsel %vm256, 0, %v255
    %v258 = vsub.s32 32, %v257
    %v259 = vshll.u32 %v250, %v257
    %v260 = vshrl.u32 %v242, %v258
    %v261 = vor.u32 %v259, %v260
    %v262 = vsub.s32 4294967266, %v257
    %v263 = vadd.s32 %v262, 127
    %v264 = vshll.u32 %v263, 23
    %v265 = vor.u32 4788187, %v264
    %v266 = vand.u32 2147483647, %v265
    %v268 = vcvt.s32.f32 %v261
    %v269 = vmul.f32 %v268, %v266
    %v270 = vxor.u32 %v269, 2147483648
    %v271 = vsel %vm188, %v270, %v269
    %v272 = vsub.s32 4, %v248
    %v273 = vsel %vm188, %v272, %v248
    %v274 = vsel %vm187, %v82, %v271
    %v275 = vsel %vm187, 0, %v273
    %v276 = vcosq.f32.pop %v274
    %v277 = vsinq.f32.pop %v274
    %vm278 = vweird.f32 %v82
    %v279 = vand.u32 %v275, 3
    %vm280 = vcmp.lt.s32.totalorder %v279, 2
    %vm281 = vcmp.eq.s32.totalorder %v279, 0
    %v282 = vxor.u32 %v277, 2147483648
    %v283 = vsel %vm281, %v276, %v282
    %vm284 = vcmp.eq.s32.totalorder %v279, 2
    %v285 = vxor.u32 %v276, 2147483648
    %v286 = vsel %vm284, %v285, %v277
    %v287 = vsel %vm280, %v283, %v286
    %v288 = vsel %vm278, nan, %v287
    %v289 = vmul.f32 %v73, %v185
    %v290 = vmul.f32 %v80, %v288
    %v291 = vand.u32 2147483647, %v81
    %vm292 = vcmp.le.f32.partialorder %v291, 0.7853982
    %vm293 = vcmp.lt.s32.totalorder %v81, 0
    %v294 = vand.u32 %v81, 2139095040
    %v295 = vshrl.u32 %v294, 23
    %v296 = vsub.s32 %v295, 127
    %v297 = vand.u32 2147483647, %v81
    %v298 = vand.u32 %v297, 8388607
    %v299 = vor.u32 %v298, 8388608
    %v300 = vsub.s32 0, %v299
    %v301 = vadd.s32 %v296, 1
    %vm302 = vcmp.gt.s32.totalorder %v301, 0
    %v303 = vsel %vm302, %v301, 0
    %v304 = vshrl.u32 %v303, 5
    %v305 = vand.u32 %v303, 31
    %v306 = vsub.s32 32, %v305
    %v307 = vshrl.u32 683565275, %v306
    %v308 = vshll.u32 683565275, %v305
    %v309 = vshrl.u32 2475754826, %v306
    %v310 = vor.u32 %v308, %v309
    %v311 = vshll.u32 2475754826, %v305
    %v312 = vshrl.u32 2131351028, %v306
    %v313 = vor.u32 %v311, %v312
    %v314 = vshll.u32 2131351028, %v305
    %v315 = vshrl.u32 2102212464, %v306
    %v316 = vor.u32 %v314, %v315
    %v317 = vshll.u32 2102212464, %v305
    %v318 = vshrl.u32 920167782, %v306
    %v319 = vor.u32 %v317, %v318
    %v320 = vshll.u32 920167782, %v305
    %v321 = vshrl.u32 1326507024, %v306
    %v322 = vor.u32 %v320, %v321
    %vm323 = vcmp.lt.s32.totalorder %v304, 1
    %vm324 = vcmp.lt.s32.totalorder %v304, 2
    %vm325 = vcmp.lt.s32.totalorder %v304, 3
    %vm326 = vcmp.lt.s32.totalorder %v304, 4
    %v327 = vsel %vm323, %v307, %v310
    %v328 = vsel %vm326, %v316, 2102212464
    %v329 = vsel %vm325, %v313, %v328
    %v330 = vsel %vm324, %v327, %v329
    %v331 = vsel %vm323, %v310, %v313
    %v332 = vsel %vm326, %v319, 920167782
    %v333 = vsel %vm325, %v316, %v332
    %v334 = vsel %vm324, %v331, %v333
    %v335 = vsel %vm323, %v313, %v316
    %v336 = vsel %vm326, %v322, 1326507024
    %v337 = vsel %vm325, %v319, %v336
    %v338 = vsel %vm324, %v335, %v337
    %v339 = vshll.u32 %v299, 8
    %v340 = vmul.u32.u64.compose %v339, %v338
    %v341 = vextract.low.u32 %v340
    %v342 = vextract.high.u32 %v340
    %v343 = vmul.u32.u64.compose %v339, %v334
    %v344 = vextract.low.u32 %v343
    %v345 = vextract.high.u32 %v343
    %v346 = vmul.u32 %v339, %v330
    %v347 = vadd.s32 %v342, %v344
    %vm348 = vc.u32 %v342, %v344
    %v349 = vadd.s32 %v345, 1
    %v350 = vsel %vm348, %v349, %v345
    %v351 = vadd.s32 %v346, %v350
    %v352 = vadd.s32 %v351, 536870912
    %v353 = vshrl.u32 %v352, 30
    %v354 = vshll.u32 %v353, 30
    %v355 = vsub.s32 %v351, %v354
    %vm356 = vcmp.lt.s32.totalorder %v355, 0
    %v357 = vsub.s32 0, %v355
    %v358 = vsel %vm356, %v357, %v355
    %v359 = vclz %v358
    %v360 = vsub.s32 %v359, 2
    %vm361 = vcmp.gt.s32.totalorder 0, %v360
    %v362 = vsel %vm361, 0, %v360
    %v363 = vsub.s32 32, %v362
    %v364 = vshll.u32 %v355, %v362
    %v365 = vshrl.u32 %v347, %v363
    %v366 = vor.u32 %v364, %v365
    %v367 = vsub.s32 4294967266, %v362
    %v368 = vadd.s32 %v367, 127
    %v369 = vshll.u32 %v368, 23
    %v370 = vor.u32 4788187, %v369
    %v371 = vand.u32 2147483647, %v370
    %v373 = vcvt.s32.f32 %v366
    %v374 = vmul.f32 %v373, %v371
    %v375 = vxor.u32 %v374, 2147483648
    %v376 = vsel %vm293, %v375, %v374
    %v377 = vsub.s32 4, %v353
    %v378 = vsel %vm293, %v377, %v353
    %v379 = vsel %vm292, %v81, %v376
    %v380 = vsel %vm292, 0, %v378
    %v381 = vcosq.f32.pop %v379
    %v382 = vsinq.f32.pop %v379
    %vm383 = vweird.f32 %v81
    %v384 = vadd.s32 %v380, 3
    %v385 = vand.u32 %v384, 3
    %vm386 = vcmp.lt.s32.totalorder %v385, 2
    %vm387 = vcmp.eq.s32.totalorder %v385, 0
    %v388 = vxor.u32 %v382, 2147483648
    %v389 = vsel %vm387, %v381, %v388
    %vm390 = vcmp.eq.s32.totalorder %v385, 2
    %v391 = vxor.u32 %v381, 2147483648
    %v392 = vsel %vm390, %v391, %v382
    %v393 = vsel %vm386, %v389, %v392
    %v394 = vsel %vm383, nan, %v393
    %v395 = vand.u32 2147483647, %v82
    %vm396 = vcmp.le.f32.partialorder %v395, 0.7853982
    %vm397 = vcmp.lt.s32.totalorder %v82, 0
    %v398 = vand.u32 %v82, 2139095040
    %v399 = vshrl.u32 %v398, 23
    %v400 = vsub.s32 %v399, 127
    %v401 = vand.u32 2147483647, %v82
    %v402 = vand.u32 %v401, 8388607
    %v403 = vor.u32 %v402, 8388608
    %v404 = vsub.s32 0, %v403
    %v405 = vadd.s32 %v400, 1
    %vm406 = vcmp.gt.s32.totalorder %v405, 0
    %v407 = vsel %vm406, %v405, 0
    %v408 = vshrl.u32 %v407, 5
    %v409 = vand.u32 %v407, 31
    %v410 = vsub.s32 32, %v409
    %v411 = vshrl.u32 683565275, %v410
    %v412 = vshll.u32 683565275, %v409
    %v413 = vshrl.u32 2475754826, %v410
    %v414 = vor.u32 %v412, %v413
    %v415 = vshll.u32 2475754826, %v409
    %v416 = vshrl.u32 2131351028, %v410
    %v417 = vor.u32 %v415, %v416
    %v418 = vshll.u32 2131351028, %v409
    %v419 = vshrl.u32 2102212464, %v410
    %v420 = vor.u32 %v418, %v419
    %v421 = vshll.u32 2102212464, %v409
    %v422 = vshrl.u32 920167782, %v410
    %v423 = vor.u32 %v421, %v422
    %v424 = vshll.u32 920167782, %v409
    %v425 = vshrl.u32 1326507024, %v410
    %v426 = vor.u32 %v424, %v425
    %vm427 = vcmp.lt.s32.totalorder %v408, 1
    %vm428 = vcmp.lt.s32.totalorder %v408, 2
    %vm429 = vcmp.lt.s32.totalorder %v408, 3
    %vm430 = vcmp.lt.s32.totalorder %v408, 4
    %v431 = vsel %vm427, %v411, %v414
    %v432 = vsel %vm430, %v420, 2102212464
    %v433 = vsel %vm429, %v417, %v432
    %v434 = vsel %vm428, %v431, %v433
    %v435 = vsel %vm427, %v414, %v417
    %v436 = vsel %vm430, %v423, 920167782
    %v437 = vsel %vm429, %v420, %v436
    %v438 = vsel %vm428, %v435, %v437
    %v439 = vsel %vm427, %v417, %v420
    %v440 = vsel %vm430, %v426, 1326507024
    %v441 = vsel %vm429, %v423, %v440
    %v442 = vsel %vm428, %v439, %v441
    %v443 = vshll.u32 %v403, 8
    %v444 = vmul.u32.u64.compose %v443, %v442
    %v445 = vextract.low.u32 %v444
    %v446 = vextract.high.u32 %v444
    %v447 = vmul.u32.u64.compose %v443, %v438
    %v448 = vextract.low.u32 %v447
    %v449 = vextract.high.u32 %v447
    %v450 = vmul.u32 %v443, %v434
    %v451 = vadd.s32 %v446, %v448
    %vm452 = vc.u32 %v446, %v448
    %v453 = vadd.s32 %v449, 1
    %v454 = vsel %vm452, %v453, %v449
    %v455 = vadd.s32 %v450, %v454
    %v456 = vadd.s32 %v455, 536870912
    %v457 = vshrl.u32 %v456, 30
    %v458 = vshll.u32 %v457, 30
    %v459 = vsub.s32 %v455, %v458
    %vm460 = vcmp.lt.s32.totalorder %v459, 0
    %v461 = vsub.s32 0, %v459
    %v462 = vsel %vm460, %v461, %v459
    %v463 = vclz %v462
    %v464 = vsub.s32 %v463, 2
    %vm465 = vcmp.gt.s32.totalorder 0, %v464
    %v466 = vsel %vm465, 0, %v464
    %v467 = vsub.s32 32, %v466
    %v468 = vshll.u32 %v459, %v466
    %v469 = vshrl.u32 %v451, %v467
    %v470 = vor.u32 %v468, %v469
    %v471 = vsub.s32 4294967266, %v466
    %v472 = vadd.s32 %v471, 127
    %v473 = vshll.u32 %v472, 23
    %v474 = vor.u32 4788187, %v473
    %v475 = vand.u32 2147483647, %v474
    %v477 = vcvt.s32.f32 %v470
    %v478 = vmul.f32 %v477, %v475
    %v479 = vxor.u32 %v478, 2147483648
    %v480 = vsel %vm397, %v479, %v478
    %v481 = vsub.s32 4, %v457
    %v482 = vsel %vm397, %v481, %v457
    %v483 = vsel %vm396, %v82, %v480
    %v484 = vsel %vm396, 0, %v482
    %v485 = vcosq.f32.pop %v483
    %v486 = vsinq.f32.pop %v483
    %vm487 = vweird.f32 %v82
    %v488 = vadd.s32 %v484, 3
    %v489 = vand.u32 %v488, 3
    %vm490 = vcmp.lt.s32.totalorder %v489, 2
    %vm491 = vcmp.eq.s32.totalorder %v489, 0
    %v492 = vxor.u32 %v486, 2147483648
    %v493 = vsel %vm491, %v485, %v492
    %vm494 = vcmp.eq.s32.totalorder %v489, 2
    %v495 = vxor.u32 %v485, 2147483648
    %v496 = vsel %vm494, %v495, %v486
    %v497 = vsel %vm490, %v493, %v496
    %v498 = vsel %vm487, nan, %v497
    %v499 = vmul.f32 %v73, %v394
    %v500 = vmul.f32 %v80, %v498
    %501 = vst [vmem:[#allocation5] sm:$0xff] %v289
    %502 = vst [vmem:[#allocation5 + $0x8] sm:$0xff] %v290
    %503 = vst [vmem:[#allocation5 + $0x10] sm:$0xff] %v499
    %504 = vst [vmem:[#allocation5 + $0x18] sm:$0xff] %v500
    // Predicated region
    $region10: #{tpu_custom_call.1} parent=1 // pred_check
      _
    $region11: #{tpu_custom_call.1} parent=1 // pred_check_branch
      %506 = sbr.rel (0) target = $region13
    $region12: #{tpu_custom_call.1} parent=1 // pred_region
      %s508 = ssub.s32 512, 512
      %509 = vsyncadd [#allocation4], %s508
      %s511 = sshll.u32 [#allocation5], 4
      %s512 = int_to_ptr.vmem [resolvable:$true] %s511
      %514 = dma.vmem_to_hbm [thread:$0]  %s512, 512, %s1, [#allocation4]
    $region13: #{tpu_custom_call.1} parent=1 // pred_fallthru
      _
    // Predicated region
    $region14: #{tpu_custom_call.1} parent=1 // pred_check
      _
    $region15: #{tpu_custom_call.1} parent=1 // pred_check_branch
      %516 = sbr.rel (0) target = $region17
    $region16: #{tpu_custom_call.1} parent=1 // pred_region
      %517 = dma.done [#allocation4], 512
    $region17: #{tpu_custom_call.1} parent=1 // pred_fallthru
      _
    %518 = vsyncpa [#allocation3], 1
    %519 = vsyncpa [#allocation4], 1

</llo_original>
